<compile_context>
chip_gen: v5e
topology: v5e:2x2
jax: 0.10.0
libtpu: 0.0.40
codegen_flags: <defaults>
</compile_context>

<pallas_src>
import functools

import jax
import jax.numpy as jnp
from jax import lax
from jax.experimental import pallas as pl
from jax.experimental.pallas import tpu as pltpu


# --------------------------------------------------------------------------
# kernels
# --------------------------------------------------------------------------

def _focal_values(x_ref, t_ref, *, alpha, gamma, eps):
    """Per-pixel focal loss for one (bn, C, T) logits block -> (bn, T) f32."""
    x = x_ref[...].astype(jnp.float32)            # (bn, C, T)
    t = t_ref[...].astype(jnp.int32)              # (bn, T)  (in-kernel cast is free)

    # numerically stable softmax denominator over the class (sublane) axis
    m = jnp.max(x, axis=1, keepdims=True)         # (bn, 1, T)
    e = jnp.exp(x - m)                            # (bn, C, T): C EUP exps / lane
    denom = jnp.sum(e, axis=1)                    # (bn, T)

    # gather exp of the target class: iota-compare + select (no one-hot
    # cast/multiply -> fewer VALU ops per (C, T) element)
    cls_idx = lax.broadcasted_iota(jnp.int32, x.shape, 1)
    e_t = jnp.sum(jnp.where(cls_idx == t[:, None, :], e, 0.0), axis=1)   # (bn, T)

    # p_t = softmax(x)[target] + eps.  Exact division keeps 1e-5 parity with
    # the reference (kernel is HBM-bound, not EUP-bound).
    p_t = e_t / denom + eps

    one_minus = 1.0 - p_t
    if gamma >= 0.0 and float(int(gamma)) == float(gamma):
        # integer gamma fast path (default gamma=2.0): VPU multiplies only
        g_int = int(gamma)
        if g_int == 0:
            weight = jnp.ones_like(one_minus)
        else:
            weight = one_minus
            for _ in range(g_int - 1):
                weight = weight * one_minus
    else:
        # float gamma: clamp the base so pow(negative, float) can't NaN.
        # TODO(synk): diverges from the reference only where softmax saturates
        # (1 - (p+eps) < 0), where the reference itself returns NaN.
        weight = jnp.power(jnp.maximum(one_minus, 0.0), gamma)

    return (-alpha) * weight * jnp.log(p_t)       # (bn, T) float32


def _focal_none_kernel(x_ref, t_ref, o_ref, *, alpha, gamma, eps):
    vals = _focal_values(x_ref, t_ref, alpha=alpha, gamma=gamma, eps=eps)
    o_ref[...] = vals.astype(o_ref.dtype)


def _focal_sum_kernel(x_ref, t_ref, ps_ref, *, alpha, gamma, eps, n_total, hw_total):
    """Fused-reduction variant: writes a (bn, 128) partial sum per grid step."""
    lv = _focal_values(x_ref, t_ref, alpha=alpha, gamma=gamma, eps=eps)   # (bn, T)
    bn, tile = lv.shape

    # mask out block padding (only emitted when padding can actually occur)
    if n_total % bn != 0:
        row = lax.broadcasted_iota(jnp.int32, lv.shape, 0) + pl.program_id(0) * bn
        lv = jnp.where(row < n_total, lv, 0.0)
    if hw_total % tile != 0:
        lane = lax.broadcasted_iota(jnp.int32, lv.shape, 1) + pl.program_id(1) * tile
        lv = jnp.where(lane < hw_total, lv, 0.0)

    # fold the lane axis down to 128 with tile-aligned static slices (VPU adds
    # only, no cross-lane XLU reshape); tile is a multiple of 128 on this path.
    acc = lv[:, 0:128]
    for j in range(1, tile // 128):
        acc = acc + lv[:, j * 128:(j + 1) * 128]
    ps_ref[...] = acc


# --------------------------------------------------------------------------
# block planning (tile / bn / VMEM limit)
# --------------------------------------------------------------------------

def _plan_blocks(N, C, HW, x_itemsize, t_itemsize, *, target_bytes=4 << 20):
    """Choose (bn, tile, vmem_limit_bytes).

    tile (lane axis): multiple of 128 (or full HW) sized so each grid step
      streams ~target_bytes of logits (per-step DMA >> ~0.35us step overhead).
    bn (batch rows): N, or a multiple of 8, grown only when the lane axis
      alone cannot reach the byte target (small images); keeps the 2-D
      target/loss blocks (8,128)-legal and the output store sublane-dense.
    The VMEM plan counts double-buffered pipeline blocks AND in-kernel f32
    temporaries, with a generation-aware budget (v7x: 64 MiB physical VMEM).
    """
    try:
        cap = int(pltpu.get_tpu_info().vmem_capacity_bytes)
    except Exception:  # no TPU / older jax: assume the smallest (v7x = 64 MiB)
        cap = 64 * 1024 * 1024
    budget = (32 << 20) if cap >= (100 << 20) else (28 << 20)

    # bytes per logits element: double-buffered block + f32 temps (x, e, iota, select)
    per_cls = 2 * x_itemsize + 16
    # bytes per (row, lane) element: double-buffered target+loss blocks + row temps
    per_row = 2 * (t_itemsize + 4) + 40

    def plan_bytes(bn, tile):
        return bn * tile * (C * per_cls + per_row)

    def legal_bn(b):
        b = max(1, min(b, N))
        if b >= N or N <= 8:
            return N                      # full batch dim is always legal
        return max(8, (b // 8) * 8)       # otherwise a multiple of 8

    bn = legal_bn(8)                      # N if N <= 8 else 8

    per_lane = bn * (C * per_cls + per_row)
    tile_budget = max(128, (budget // per_lane) // 128 * 128)
    tile_target = max(128, (target_bytes // max(1, bn * C * x_itemsize)) // 128 * 128)
    tile = min(tile_budget, tile_target)

    if HW <= tile:
        tile = HW                         # full-extent lane block (always legal)
        if bn < N:                        # lanes exhausted: grow bn toward target
            row_bytes = HW * (C * per_cls + per_row)
            want = min(target_bytes // max(1, C * HW * x_itemsize),
                       budget // max(1, row_bytes))
            bn = legal_bn(max(bn, want))

    plan = plan_bytes(bn, tile)
    vmem_limit = int(min(max(plan + (8 << 20), 32 << 20), cap - (8 << 20)))
    return bn, tile, vmem_limit


# --------------------------------------------------------------------------
# wrapper
# --------------------------------------------------------------------------

def focal_loss(logits, target, *, alpha, gamma=2.0, reduction="none", eps=1e-6):
    """Focal loss matching PyTorch FocalLoss.forward.

    logits: (N, C, H, W) float32 / bfloat16
    target: (N, H, W)    integer class indices in [0, C)
    """
    if reduction not in ("none", "mean", "sum"):
        raise NotImplementedError(f"Invalid reduction mode: {reduction}")

    N, C, H, W = logits.shape
    HW = H * W

    # free reshapes only — no transpose / pad / dtype-cast HBM passes
    x = logits.reshape(N, C, HW)
    t = target.reshape(N, HW)
    if not (jnp.issubdtype(t.dtype, jnp.integer) and jnp.dtype(t.dtype).itemsize == 4):
        t = t.astype(jnp.int32)           # rare path (e.g. int64 targets)

    bn, tile, vmem_limit = _plan_blocks(
        N, C, HW, jnp.dtype(logits.dtype).itemsize, jnp.dtype(t.dtype).itemsize)
    nb = (N + bn - 1) // bn
    nt = (HW + tile - 1) // tile

    in_specs = [
        # read the NCHW layout directly: one (bn, C, tile) slab per step
        pl.BlockSpec((bn, C, tile), lambda n, i: (n, 0, i)),
        pl.BlockSpec((bn, tile), lambda n, i: (n, i)),
    ]
    cparams = pltpu.CompilerParams(
        dimension_semantics=("parallel", "parallel"),   # independent output blocks
        vmem_limit_bytes=vmem_limit,
    )

    fuse = reduction in ("mean", "sum") and tile % 128 == 0
    if fuse:
        kernel = functools.partial(
            _focal_sum_kernel, alpha=float(alpha), gamma=float(gamma),
            eps=float(eps), n_total=N, hw_total=HW)
        partial = pl.pallas_call(
            kernel,
            out_shape=jax.ShapeDtypeStruct((nb, nt, bn, 128), jnp.float32),
            grid_spec=pltpu.PrefetchScalarGridSpec(
                num_scalar_prefetch=0,
                grid=(nb, nt),
                in_specs=in_specs,
                out_specs=pl.BlockSpec((pl.Squeezed(), pl.Squeezed(), bn, 128),
                                       lambda n, i: (n, i, 0, 0)),
            ),
            compiler_params=cparams,
        )(x, t)
        total = jnp.sum(partial)
        if reduction == "sum":
            return total
        return total / (N * HW)

    kernel = functools.partial(
        _focal_none_kernel, alpha=float(alpha), gamma=float(gamma), eps=float(eps))
    loss = pl.pallas_call(
        kernel,
        out_shape=jax.ShapeDtypeStruct((N, HW), jnp.float32),
        grid_spec=pltpu.PrefetchScalarGridSpec(
            num_scalar_prefetch=0,
            grid=(nb, nt),
            in_specs=in_specs,
            out_specs=pl.BlockSpec((bn, tile), lambda n, i: (n, i)),
        ),
        compiler_params=cparams,
    )(x, t)
    loss_tmp = loss.reshape(N, H, W)

    if reduction == "none":
        return loss_tmp
    elif reduction == "mean":                 # non-128-aligned tile fallback
        return jnp.mean(loss_tmp)
    else:
        return jnp.sum(loss_tmp)


# --------------------------------------------------------------------------
# pure-JAX reference & self-test
# --------------------------------------------------------------------------

def _focal_loss_ref(logits, target, alpha, gamma, eps=1e-6):
    """Pure-JAX reference (PyTorch FocalLoss semantics)."""
    x = logits.astype(jnp.float32)
    p = jax.nn.softmax(x, axis=1) + eps
    onehot = jax.nn.one_hot(target, x.shape[1], axis=1, dtype=jnp.float32)
    focal = -alpha * jnp.power(1.0 - p, gamma) * jnp.log(p)
    return jnp.sum(onehot * focal, axis=1)


if __name__ == "__main__":
    key = jax.random.PRNGKey(0)
    k_x, k_t = jax.random.split(key)
    N, C, H, W = 2, 4, 16, 16
    logits = jax.random.normal(k_x, (N, C, H, W), dtype=jnp.float32)
    target = jax.random.randint(k_t, (N, H, W), 0, C, dtype=jnp.int32)

    alpha, gamma = 0.5, 2.0
    ref = _focal_loss_ref(logits, target, alpha, gamma)

    # reduction='none' (module default)
    loss_none = focal_loss(logits, target, alpha=alpha, gamma=gamma, reduction="none")
    jax.block_until_ready(loss_none)
    assert loss_none.shape == (N, H, W)
    assert jnp.allclose(loss_none, ref, atol=1e-5, rtol=1e-5)

    # reduction='mean' (docstring example) — fused in-kernel partial sums
    loss_mean = focal_loss(logits, target, alpha=alpha, gamma=gamma, reduction="mean")
    jax.block_until_ready(loss_mean)
    assert jnp.allclose(loss_mean, jnp.mean(ref), atol=1e-5, rtol=1e-5)

    # reduction='sum' — fused path as well
    loss_sum = focal_loss(logits, target, alpha=alpha, gamma=gamma, reduction="sum")
    jax.block_until_ready(loss_sum)
    assert jnp.allclose(loss_sum, jnp.sum(ref), atol=1e-4, rtol=1e-5)

    # bf16 logits: halves the dominant HBM read; kernel upcasts to f32
    logits_bf16 = logits.astype(jnp.bfloat16)
    loss_bf16 = focal_loss(logits_bf16, target, alpha=alpha, gamma=gamma, reduction="none")
    jax.block_until_ready(loss_bf16)
    ref_bf16 = _focal_loss_ref(logits_bf16, target, alpha, gamma)
    assert jnp.allclose(loss_bf16, ref_bf16, atol=1e-5, rtol=1e-5)

    # odd, non-(8,128)-aligned shapes: full-extent blocks, unfused mean fallback
    N2, C2, H2, W2 = 3, 5, 7, 9
    k_x2, k_t2 = jax.random.split(jax.random.PRNGKey(1))
    logits2 = jax.random.normal(k_x2, (N2, C2, H2, W2), dtype=jnp.float32)
    target2 = jax.random.randint(k_t2, (N2, H2, W2), 0, C2, dtype=jnp.int32)
    ref2 = _focal_loss_ref(logits2, target2, alpha, gamma)
    out2 = focal_loss(logits2, target2, alpha=alpha, gamma=gamma, reduction="none")
    jax.block_until_ready(out2)
    assert jnp.allclose(out2, ref2, atol=1e-5, rtol=1e-5)
    mean2 = focal_loss(logits2, target2, alpha=alpha, gamma=gamma, reduction="mean")
    jax.block_until_ready(mean2)
    assert jnp.allclose(mean2, jnp.mean(ref2), atol=1e-5, rtol=1e-5)

    print("KERNEL_OK")
</pallas_src>

<mosaic_0001>
module attributes {stable_mosaic.version = 11 : i64} {
  func.func @_focal_none_kernel(%arg0: i32, %arg1: i32, %arg2: memref<2x4x256xf32, #tpu.memory_space<vmem>>, %arg3: memref<2x256xi32, #tpu.memory_space<vmem>>, %arg4: memref<2x256xf32, #tpu.memory_space<vmem>>) attributes {dimension_semantics = [#tpu.dimension_semantics<parallel>, #tpu.dimension_semantics<parallel>], iteration_bounds = array<i64: 1, 1>, scalar_prefetch = 0 : i64, scratch_operands = 0 : i64, tpu.core_type = #tpu.core_type<tc>, window_params = [{transform_indices = @transform_0, window_bounds = array<i64: 2, 4, 256>}, {transform_indices = @transform_1, window_bounds = array<i64: 2, 256>}, {transform_indices = @transform_2, window_bounds = array<i64: 2, 256>}]} {
    %c0 = arith.constant 0 : index
    %c0_0 = arith.constant 0 : index
    %c0_1 = arith.constant 0 : index
    %0 = vector.load %arg2[%c0, %c0_0, %c0_1] : memref<2x4x256xf32, #tpu.memory_space<vmem>>, vector<2x4x256xf32>
    %c0_2 = arith.constant 0 : index
    %c0_3 = arith.constant 0 : index
    %1 = vector.load %arg3[%c0_2, %c0_3] : memref<2x256xi32, #tpu.memory_space<vmem>>, vector<2x256xi32>
    %cst = arith.constant dense<0xFF800000> : vector<2x256xf32>
    %2 = vector.multi_reduction <maximumf>, %0, %cst [1] : vector<2x4x256xf32> to vector<2x256xf32>
    %3 = vector.shape_cast %2 : vector<2x256xf32> to vector<2x1x256xf32>
    %4 = vector.broadcast %3 : vector<2x1x256xf32> to vector<2x4x256xf32>
    %5 = arith.subf %0, %4 : vector<2x4x256xf32>
    %6 = math.exp %5 : vector<2x4x256xf32>
    %cst_4 = arith.constant dense<0.000000e+00> : vector<2x256xf32>
    %7 = vector.multi_reduction <add>, %6, %cst_4 [1] : vector<2x4x256xf32> to vector<2x256xf32>
    %8 = tpu.iota {dimensions = array<i32: 1>} : vector<2x4x256xi32>
    %9 = vector.shape_cast %1 : vector<2x256xi32> to vector<2x1x256xi32>
    %10 = vector.broadcast %9 : vector<2x1x256xi32> to vector<2x4x256xi32>
    %11 = arith.cmpi eq, %8, %10 : vector<2x4x256xi32>
    %cst_5 = arith.constant 0.000000e+00 : f32
    %12 = vector.broadcast %cst_5 : f32 to vector<2x4x256xf32>
    %13 = arith.select %11, %6, %12 : vector<2x4x256xi1>, vector<2x4x256xf32>
    %cst_6 = arith.constant dense<0.000000e+00> : vector<2x256xf32>
    %14 = vector.multi_reduction <add>, %13, %cst_6 [1] : vector<2x4x256xf32> to vector<2x256xf32>
    %15 = arith.divf %14, %7 : vector<2x256xf32>
    %cst_7 = arith.constant 9.99999997E-7 : f32
    %16 = vector.broadcast %cst_7 : f32 to vector<2x256xf32>
    %17 = arith.addf %15, %16 : vector<2x256xf32>
    %cst_8 = arith.constant 1.000000e+00 : f32
    %18 = vector.broadcast %cst_8 : f32 to vector<2x256xf32>
    %19 = arith.subf %18, %17 : vector<2x256xf32>
    %20 = arith.mulf %19, %19 : vector<2x256xf32>
    %cst_9 = arith.constant -5.000000e-01 : f32
    %21 = vector.broadcast %cst_9 : f32 to vector<2x256xf32>
    %22 = arith.mulf %21, %20 : vector<2x256xf32>
    %23 = math.log %17 : vector<2x256xf32>
    %24 = arith.mulf %22, %23 : vector<2x256xf32>
    %c0_10 = arith.constant 0 : index
    %c0_11 = arith.constant 0 : index
    %25 = vector.load %arg4[%c0_10, %c0_11] : memref<2x256xf32, #tpu.memory_space<vmem>>, vector<2x256xf32>
    tpu.vector_store %arg4[%c0_10, %c0_11], %24 {strides = array<i32>} : memref<2x256xf32, #tpu.memory_space<vmem>>, vector<2x256xf32>,
    return
  }
  func.func @transform_0(%arg0: i32, %arg1: i32) -> (i32, i32, i32) {
    %c0_i32 = arith.constant 0 : i32
    %c0_i32_0 = arith.constant 0 : i32
    return %arg0, %c0_i32, %arg1 : i32, i32, i32
  }
  func.func @transform_1(%arg0: i32, %arg1: i32) -> (i32, i32) {
    %c0_i32 = arith.constant 0 : i32
    return %arg0, %arg1 : i32, i32
  }
  func.func @transform_2(%arg0: i32, %arg1: i32) -> (i32, i32) {
    %c0_i32 = arith.constant 0 : i32
    return %arg0, %arg1 : i32, i32
  }
}

</mosaic_0001>

<llo_original>
// kernel: tpu_custom_call.1
$region0: #{tpu_custom_call.1}
  #allocation0 [shape = 'u32[]', space=smem, size = 0x4, offset = 0x4, fixed_abs, tag = 'smem constant byte address 0x4 - core index']
  #allocation1 [shape = 'u32[72,128]{1,0:T(1,128)}', space=vmem, size = 0x9000, scoped, tag = 'internal scratch']
  %s0 = inlined_call_operand.hbm [shape: f32[2,4,256], index: 0, kind: input, shape index: {}]
  %s1 = inlined_call_operand.hbm [shape: s32[2,256], index: 1, kind: input, shape index: {}]
  %s2 = inlined_call_operand.hbm [shape: f32[2,256], index: 2, kind: output, shape index: {}]
  %s3 = sld [smem:[#allocation0]]
  $region26: #{tpu_custom_call.1} parent=0
    _
  %s5 = ssub.s32 1, %s3
  %s6 = scalar_select 0, %s5, %s3
  $region1: #{tpu_custom_call.1} parent=0
    #allocation2 [shape = 'u8[8192]{0}', space=vmem, size = 0x2000, scoped, tag = 'input window, operand 0, single buffered']
    #allocation3 [shape = 's32[1]{0}', space=sflag, size = 0x4, scoped, tag = 'scoped memory for tpu_custom_call.1']
    #allocation4 [shape = 's32[1]{0}', space=sflag, size = 0x4, scoped, tag = 'scoped memory for tpu_custom_call.1']
    #allocation5 [shape = 'u8[2048]{0}', space=vmem, size = 0x800, scoped, tag = 'input window, operand 1, single buffered']
    #allocation6 [shape = 's32[1]{0}', space=sflag, size = 0x4, scoped, tag = 'scoped memory for tpu_custom_call.1']
    #allocation7 [shape = 'u8[2048]{0}', space=vmem, size = 0x800, scoped, tag = 'output window, operand 0, single buffered']
    %7 = vsyncpa [#allocation3], 0
    %8 = vsyncpa [#allocation6], 0
    %9 = vsyncpa [#allocation4], 0
    // Predicated region
    $region2: #{tpu_custom_call.1} parent=1 // pred_check
      _
    $region3: #{tpu_custom_call.1} parent=1 // pred_check_branch
      %11 = sbr.rel (0) target = $region5
    $region4: #{tpu_custom_call.1} parent=1 // pred_region
      %13 = vsyncadd [#allocation3], 0
      %s14 = sshll.u32 %s0, 4
      %s15 = int_to_ptr.hbm [resolvable:$true] %s14
      %s16 = sshll.u32 [#allocation2], 4
      %s17 = int_to_ptr.vmem [resolvable:$true] %s16
      %22 = dma.hbm_to_vmem [thread:$0]  %s15, 256, %s17, [#allocation3], 128, 128, 8
    $region5: #{tpu_custom_call.1} parent=1 // pred_fallthru
      _
    // Predicated region
    $region6: #{tpu_custom_call.1} parent=1 // pred_check
      _
    $region7: #{tpu_custom_call.1} parent=1 // pred_check_branch
      %24 = sbr.rel (0) target = $region9
    $region8: #{tpu_custom_call.1} parent=1 // pred_region
      %26 = vsyncadd [#allocation6], 0
      %s28 = sshll.u32 %s1, 4
      %s29 = int_to_ptr.hbm [resolvable:$true] %s28
      %s30 = sshll.u32 [#allocation5], 4
      %s31 = int_to_ptr.vmem [resolvable:$true] %s30
      %33 = dma.hbm_to_vmem [thread:$0]  %s29, 64, %s31, [#allocation6]
    $region9: #{tpu_custom_call.1} parent=1 // pred_fallthru
      _
    // Predicated region
    $region10: #{tpu_custom_call.1} parent=1 // pred_check
      _
    $region11: #{tpu_custom_call.1} parent=1 // pred_check_branch
      %35 = sbr.rel (0) target = $region13
    $region12: #{tpu_custom_call.1} parent=1 // pred_region
      %37 = dma.done [#allocation3], 256
    $region13: #{tpu_custom_call.1} parent=1 // pred_fallthru
      _
    // Predicated region
    $region14: #{tpu_custom_call.1} parent=1 // pred_check
      _
    $region15: #{tpu_custom_call.1} parent=1 // pred_check_branch
      %39 = sbr.rel (0) target = $region17
    $region16: #{tpu_custom_call.1} parent=1 // pred_region
      %41 = dma.done [#allocation6], 64
    $region17: #{tpu_custom_call.1} parent=1 // pred_fallthru
      _
    %v42 = vld [vmem:[#allocation2] sm:$0xff]
    %v43 = vld [vmem:[#allocation2 + $0x8] sm:$0xff]
    %v44 = vld [vmem:[#allocation5] sm:$0xf]
    %47 = vst [vmem:[#allocation1] ss:$2 sm:$0xff] %v42
    %v48 = vld.sshfl [vmem:[#allocation1] sm:$0xff pattern:$0x75316420]
    %v49 = vld.sshfl [vmem:[#allocation1 + $0x8] sm:$0xff pattern:$0x75316420]
    %s50 = scalar_lea.vmem [#allocation1], 16
    %51 = vst [vmem:[%s50] ss:$2 sm:$0xff] %v43
    %v52 = vld.sshfl [vmem:[#allocation1 + $0x10] sm:$0xff pattern:$0x75316420]
    %v53 = vld.sshfl [vmem:[#allocation1 + $0x18] sm:$0xff pattern:$0x75316420]
    %vm58 = vcmask 1043456
    %v59 = vsel %vm58, %v48, -inf
    %v60 = vrot.slane %v59, 4
    %v61 = vmax.f32 %v59, %v60
    %v62 = vrot.slane %v61, 2
    %v63 = vmax.f32 %v61, %v62
    %v64 = vrot.slane %v63, 1
    %v65 = vmax.f32 %v63, %v64
    %v66 = vsel %vm58, %v49, -inf
    %v67 = vrot.slane %v66, 4
    %v68 = vmax.f32 %v66, %v67
    %v69 = vrot.slane %v68, 2
    %v70 = vmax.f32 %v68, %v69
    %v71 = vrot.slane %v70, 1
    %v72 = vmax.f32 %v70, %v71
    %v73 = vsel %vm58, %v52, -inf
    %v74 = vrot.slane %v73, 4
    %v75 = vmax.f32 %v73, %v74
    %v76 = vrot.slane %v75, 2
    %v77 = vmax.f32 %v75, %v76
    %v78 = vrot.slane %v77, 1
    %v79 = vmax.f32 %v77, %v78
    %v80 = vsel %vm58, %v53, -inf
    %v81 = vrot.slane %v80, 4
    %v82 = vmax.f32 %v80, %v81
    %v83 = vrot.slane %v82, 2
    %v84 = vmax.f32 %v82, %v83
    %v85 = vrot.slane %v84, 1
    %v86 = vmax.f32 %v84, %v85
    %v91 = vrot.slane %v72, 4
    %v92 = vrot.slane %v86, 4
    %v93 = vsel %vm58, %v65, %v91
    %v94 = vsel %vm58, %v79, %v92
    %v97 = vsub.f32 %v42, %v93
    %v98 = vsub.f32 %v43, %v94
    %v99 = vmul.f32 %v97, 1.442695
    %v100 = vpow.pop %v99
    %v101 = vmul.f32 %v98, 1.442695
    %v102 = vpow.pop %v101
    %105 = vst [vmem:[#allocation1] ss:$2 sm:$0xff] %v100
    %v106 = vld.sshfl [vmem:[#allocation1] sm:$0xff pattern:$0x75316420]
    %v107 = vld.sshfl [vmem:[#allocation1 + $0x8] sm:$0xff pattern:$0x75316420]
    %s108 = scalar_lea.vmem [#allocation1], 16
    %109 = vst [vmem:[%s108] ss:$2 sm:$0xff] %v102
    %v110 = vld.sshfl [vmem:[#allocation1 + $0x10] sm:$0xff pattern:$0x75316420]
    %v111 = vld.sshfl [vmem:[#allocation1 + $0x18] sm:$0xff pattern:$0x75316420]
    %v116 = vsel %vm58, %v106, 0.0
    %v117 = vrot.slane %v116, 4
    %v118 = vadd.f32 %v116, %v117
    %v119 = vrot.slane %v118, 2
    %v120 = vadd.f32 %v118, %v119
    %v121 = vrot.slane %v120, 1
    %v122 = vadd.f32 %v120, %v121
    %v123 = vsel %vm58, %v107, 0.0
    %v124 = vrot.slane %v123, 4
    %v125 = vadd.f32 %v123, %v124
    %v126 = vrot.slane %v125, 2
    %v127 = vadd.f32 %v125, %v126
    %v128 = vrot.slane %v127, 1
    %v129 = vadd.f32 %v127, %v128
    %v130 = vsel %vm58, %v110, 0.0
    %v131 = vrot.slane %v130, 4
    %v132 = vadd.f32 %v130, %v131
    %v133 = vrot.slane %v132, 2
    %v134 = vadd.f32 %v132, %v133
    %v135 = vrot.slane %v134, 1
    %v136 = vadd.f32 %v134, %v135
    %v137 = vsel %vm58, %v111, 0.0
    %v138 = vrot.slane %v137, 4
    %v139 = vadd.f32 %v137, %v138
    %v140 = vrot.slane %v139, 2
    %v141 = vadd.f32 %v139, %v140
    %v142 = vrot.slane %v141, 1
    %v143 = vadd.f32 %v141, %v142
    %v144 = vlaneseq
    %v145 = vshrl.u32 %v144, 7
    %v146 = vrot.slane %v44, 1
    %v147 = vrot.slane %v44, 2
    %v148 = vrot.slane %v44, 3
    %vm149 = vcmask 1040384
    %v150 = vsel %vm149, %v44, %v146
    %vm151 = vcmask 1042434
    %v152 = vsel %vm151, %v147, %v148
    %vm153 = vcmask 1041408
    %v154 = vsel %vm153, %v150, %v152
    %vm155 = vcmask 1041409
    %v156 = vsel %vm155, %v44, %v146
    %vm157 = vcmask 1043459
    %v158 = vsel %vm157, %v147, %v148
    %vm159 = vcmask 1042433
    %v160 = vsel %vm159, %v156, %v158
    %v161 = vrot.slane %v160, 1
    %v162 = vperm.slane %v154, 0
    %v163 = vperm.slane %v154, 1
    %v164 = vperm.slane %v161, 0
    %v165 = vperm.slane %v161, 1
    %vm166 = vcmp.eq.s32.totalorder %v145, %v162
    %vm167 = vcmp.eq.s32.totalorder %v145, %v163
    %vm168 = vcmp.eq.s32.totalorder %v145, %v164
    %vm169 = vcmp.eq.s32.totalorder %v145, %v165
    %170 = vst [vmem:[#allocation1] ss:$2 sm:$0xff] %v100
    %v171 = vld.sshfl [vmem:[#allocation1] sm:$0xff pattern:$0x75316420]
    %v172 = vld.sshfl [vmem:[#allocation1 + $0x8] sm:$0xff pattern:$0x75316420]
    %s173 = scalar_lea.vmem [#allocation1], 16
    %174 = vst [vmem:[%s173] ss:$2 sm:$0xff] %v102
    %v175 = vld.sshfl [vmem:[#allocation1 + $0x10] sm:$0xff pattern:$0x75316420]
    %v176 = vld.sshfl [vmem:[#allocation1 + $0x18] sm:$0xff pattern:$0x75316420]
    %v181 = vsel %vm166, %v171, 0.0
    %v182 = vsel %vm167, %v172, 0.0
    %v183 = vsel %vm168, %v175, 0.0
    %v184 = vsel %vm169, %v176, 0.0
    %v185 = vsel %vm58, %v181, 0.0
    %v186 = vrot.slane %v185, 4
    %v187 = vadd.f32 %v185, %v186
    %v188 = vrot.slane %v187, 2
    %v189 = vadd.f32 %v187, %v188
    %v190 = vrot.slane %v189, 1
    %v191 = vadd.f32 %v189, %v190
    %v192 = vsel %vm58, %v182, 0.0
    %v193 = vrot.slane %v192, 4
    %v194 = vadd.f32 %v192, %v193
    %v195 = vrot.slane %v194, 2
    %v196 = vadd.f32 %v194, %v195
    %v197 = vrot.slane %v196, 1
    %v198 = vadd.f32 %v196, %v197
    %v199 = vsel %vm58, %v183, 0.0
    %v200 = vrot.slane %v199, 4
    %v201 = vadd.f32 %v199, %v200
    %v202 = vrot.slane %v201, 2
    %v203 = vadd.f32 %v201, %v202
    %v204 = vrot.slane %v203, 1
    %v205 = vadd.f32 %v203, %v204
    %v206 = vsel %vm58, %v184, 0.0
    %v207 = vrot.slane %v206, 4
    %v208 = vadd.f32 %v206, %v207
    %v209 = vrot.slane %v208, 2
    %v210 = vadd.f32 %v208, %v209
    %v211 = vrot.slane %v210, 1
    %v212 = vadd.f32 %v210, %v211
    %v213 = vrcp.pop %v122
    %v214 = vmul.f32 %v122, %v213
    %v215 = vsub.f32 1.0, %v214
    %v216 = vmul.f32 %v213, %v215
    %v217 = vadd.f32 %v213, %v216
    %vm218 = vweird.f32 %v122
    %vm219 = vweird.f32 %v213
    %vm220 = vmor %vm218, %vm219
    %v221 = vsel %vm220, %v213, %v217
    %v222 = vand.u32 2147483647, %v122
    %vm223 = vcmp.eq.f32.partialorder %v222, 8.507059e+37
    %v224 = vand.u32 %v122, 2147483648
    %v225 = vor.u32 1.1754944e-38, %v224
    %v226 = vsel %vm223, %v225, %v221
    %v227 = vmul.f32 %v191, %v226
    %v228 = vrcp.pop %v129
    %v229 = vmul.f32 %v129, %v228
    %v230 = vsub.f32 1.0, %v229
    %v231 = vmul.f32 %v228, %v230
    %v232 = vadd.f32 %v228, %v231
    %vm233 = vweird.f32 %v129
    %vm234 = vweird.f32 %v228
    %vm235 = vmor %vm233, %vm234
    %v236 = vsel %vm235, %v228, %v232
    %v237 = vand.u32 2147483647, %v129
    %vm238 = vcmp.eq.f32.partialorder %v237, 8.507059e+37
    %v239 = vand.u32 %v129, 2147483648
    %v240 = vor.u32 1.1754944e-38, %v239
    %v241 = vsel %vm238, %v240, %v236
    %v242 = vmul.f32 %v198, %v241
    %v243 = vrcp.pop %v136
    %v244 = vmul.f32 %v136, %v243
    %v245 = vsub.f32 1.0, %v244
    %v246 = vmul.f32 %v243, %v245
    %v247 = vadd.f32 %v243, %v246
    %vm248 = vweird.f32 %v136
    %vm249 = vweird.f32 %v243
    %vm250 = vmor %vm248, %vm249
    %v251 = vsel %vm250, %v243, %v247
    %v252 = vand.u32 2147483647, %v136
    %vm253 = vcmp.eq.f32.partialorder %v252, 8.507059e+37
    %v254 = vand.u32 %v136, 2147483648
    %v255 = vor.u32 1.1754944e-38, %v254
    %v256 = vsel %vm253, %v255, %v251
    %v257 = vmul.f32 %v205, %v256
    %v258 = vrcp.pop %v143
    %v259 = vmul.f32 %v143, %v258
    %v260 = vsub.f32 1.0, %v259
    %v261 = vmul.f32 %v258, %v260
    %v262 = vadd.f32 %v258, %v261
    %vm263 = vweird.f32 %v143
    %vm264 = vweird.f32 %v258
    %vm265 = vmor %vm263, %vm264
    %v266 = vsel %vm265, %v258, %v262
    %v267 = vand.u32 2147483647, %v143
    %vm268 = vcmp.eq.f32.partialorder %v267, 8.507059e+37
    %v269 = vand.u32 %v143, 2147483648
    %v270 = vor.u32 1.1754944e-38, %v269
    %v271 = vsel %vm268, %v270, %v266
    %v272 = vmul.f32 %v212, %v271
    %v273 = vadd.f32 %v227, 1e-06
    %v274 = vadd.f32 %v242, 1e-06
    %v275 = vadd.f32 %v257, 1e-06
    %v276 = vadd.f32 %v272, 1e-06
    %v277 = vsub.f32 1.0, %v273
    %v278 = vsub.f32 1.0, %v274
    %v279 = vsub.f32 1.0, %v275
    %v280 = vsub.f32 1.0, %v276
    %v281 = vmul.f32 %v277, %v277
    %v282 = vmul.f32 %v278, %v278
    %v283 = vmul.f32 %v279, %v279
    %v284 = vmul.f32 %v280, %v280
    %v285 = vmul.f32 %v281, -0.5
    %v286 = vmul.f32 %v282, -0.5
    %v287 = vmul.f32 %v283, -0.5
    %v288 = vmul.f32 %v284, -0.5
    %v289 = vlog2.pop %v273
    %v290 = vmul.f32 %v289, 0.6931472
    %v291 = vlog2.pop %v274
    %v292 = vmul.f32 %v291, 0.6931472
    %v293 = vlog2.pop %v275
    %v294 = vmul.f32 %v293, 0.6931472
    %v295 = vlog2.pop %v276
    %v296 = vmul.f32 %v295, 0.6931472
    %v297 = vmul.f32 %v285, %v290
    %v298 = vmul.f32 %v286, %v292
    %v299 = vmul.f32 %v287, %v294
    %v300 = vmul.f32 %v288, %v296
    %v305 = vrot.slane %v298, 6
    %v306 = vrot.slane %v300, 6
    %v307 = vsel %vm153, %v297, %v305
    %v308 = vsel %vm153, %v299, %v306
    %vm309 = vcmask 1044484
    %v310 = vsel %vm309, %v307, %v307
    %vm311 = vcmask 1046534
    %v312 = vsel %vm311, %v307, %v310
    %v313 = vrot.slane %v308, 7
    %v314 = vsel %vm155, %v313, %v312
    %v315 = vsel %vm157, %v313, %v314
    %vm316 = vcmask 1045509
    %v317 = vsel %vm316, %v313, %v315
    %vm318 = vcmask 1047559
    %v319 = vsel %vm318, %v313, %v317
    %321 = vst [vmem:[#allocation7] sm:$0xf] %v319
    // Predicated region
    $region18: #{tpu_custom_call.1} parent=1 // pred_check
      _
    $region19: #{tpu_custom_call.1} parent=1 // pred_check_branch
      %323 = sbr.rel (0) target = $region21
    $region20: #{tpu_custom_call.1} parent=1 // pred_region
      %325 = vsyncadd [#allocation4], 0
      %s327 = sshll.u32 [#allocation7], 4
      %s328 = int_to_ptr.vmem [resolvable:$true] %s327
      %s329 = sshll.u32 %s2, 4
      %s330 = int_to_ptr.hbm [resolvable:$true] %s329
      %332 = dma.vmem_to_hbm [thread:$0]  %s328, 64, %s330, [#allocation4]
    $region21: #{tpu_custom_call.1} parent=1 // pred_fallthru
      _
    // Predicated region
    $region22: #{tpu_custom_call.1} parent=1 // pred_check
      _
    $region23: #{tpu_custom_call.1} parent=1 // pred_check_branch
      %334 = sbr.rel (0) target = $region25
    $region24: #{tpu_custom_call.1} parent=1 // pred_region
      %336 = dma.done [#allocation4], 64
    $region25: #{tpu_custom_call.1} parent=1 // pred_fallthru
      _
    %337 = vsyncpa [#allocation3], 1
    %338 = vsyncpa [#allocation6], 1
    %339 = vsyncpa [#allocation4], 1

</llo_original>
